<compile_context>
chip_gen: v7x
topology: tpu7x:2x2x1
jax: 0.10.0
libtpu: 0.0.40
codegen_flags: <defaults>
</compile_context>

<pallas_src>
import jax
import jax.numpy as jnp
from jax.experimental import pallas as pl
from jax.experimental.pallas import tpu as pltpu


def _round_up(v, m):
    return (v + m - 1) // m * m


# ----------------------------------------------------------------------------
# Single GCN layer kernel:  out = relu((A @ X) @ W + b)   (aggregate first)
#   grid = (row tiles of A / out, K tiles over the aggregation/node axis)
# ----------------------------------------------------------------------------
def _gcn_layer_kernel(a_ref, x_ref, w_ref, b_ref, o_ref, acc_ref):
    k = pl.program_id(1)

    @pl.when(k == 0)
    def _init():
        acc_ref[...] = jnp.zeros_like(acc_ref)

    # acc[rows_i] += A[rows_i, cols_k] @ X[cols_k, :]   (bf16 MXU, f32 acc)
    acc_ref[...] += jnp.dot(a_ref[...], x_ref[...],
                            preferred_element_type=jnp.float32)

    @pl.when(k == pl.num_programs(1) - 1)
    def _finish():
        z = jnp.dot(acc_ref[...].astype(jnp.bfloat16), w_ref[...],
                    preferred_element_type=jnp.float32)
        o_ref[...] = jnp.maximum(z + b_ref[...], 0.0).astype(o_ref.dtype)


def _gcn_relu_layer(a_p, x_p, w, b, *, out_dtype, tm):
    """relu(A_p @ X_p @ W + b).

    a_p: (n_pad, n_pad) bf16 normalized adjacency, n_pad multiple of tm.
    x_p: (n_pad, f_in_p) bf16 features, f_in_p multiple of 128.
    """
    n_pad = a_p.shape[0]
    f_in_p = x_p.shape[1]
    f_in, f_out = w.shape
    f_out_p = _round_up(f_out, 128)

    w_p = jnp.pad(w, ((0, f_in_p - f_in), (0, f_out_p - f_out))).astype(jnp.bfloat16)
    b_p = jnp.pad(b, (0, f_out_p - f_out)).astype(jnp.float32).reshape(1, f_out_p)

    tk = tm  # A column tile == X row tile; n_pad is a multiple of tm == tk
    grid = (n_pad // tm, n_pad // tk)

    return pl.pallas_call(
        _gcn_layer_kernel,
        out_shape=jax.ShapeDtypeStruct((n_pad, f_out_p), out_dtype),
        grid=grid,
        in_specs=[
            pl.BlockSpec((tm, tk), lambda i, k: (i, k)),           # A tile
            pl.BlockSpec((tk, f_in_p), lambda i, k: (k, 0)),       # X row tile
            pl.BlockSpec((f_in_p, f_out_p), lambda i, k: (0, 0)),  # W (resident)
            pl.BlockSpec((1, f_out_p), lambda i, k: (0, 0)),       # bias
        ],
        out_specs=pl.BlockSpec((tm, f_out_p), lambda i, k: (i, 0)),
        scratch_shapes=[pltpu.VMEM((tm, f_in_p), jnp.float32)],    # A@X accumulator
        compiler_params=pltpu.CompilerParams(
            # Row tiles are independent -> parallel (megacore on v7x);
            # K is a reduction into the accumulator -> arbitrary (last axis).
            dimension_semantics=("parallel", "arbitrary"),
            # Safe on every generation (v7x has 64 MiB physical VMEM); with
            # K-tiling the working set is far below this anyway.
            vmem_limit_bytes=48 * 1024 * 1024,
        ),
    )(a_p, x_p, w_p, b_p)


# ----------------------------------------------------------------------------
# Plain-JAX glue: densify + normalize adjacency directly at padded size in bf16
# (matches PyG gcn_norm for edge_weight=None).
# ----------------------------------------------------------------------------
def gcn_normalized_adjacency_padded(edge_index, num_nodes, n_pad):
    src, tgt = edge_index[0], edge_index[1]
    # Duplicate edges scatter-ADD; explicit self loops are dropped and replaced
    # by exactly one weight-1 self loop per node (add_remaining_self_loops with
    # all-ones edge weights).
    w = (src != tgt).astype(jnp.float32)
    a = jnp.zeros((n_pad, n_pad), jnp.float32)
    a = a.at[tgt, src].add(w)                       # aggregate at the target
    diag = jnp.arange(num_nodes)
    a = a.at[diag, diag].add(1.0)                   # self loops (real nodes only)
    deg = a.sum(axis=1)                             # padded rows have deg 0
    dinv_sqrt = jnp.where(deg > 0.0, jax.lax.rsqrt(deg), 0.0)
    # Normalize + cast in one fused elementwise pass; padded rows/cols stay 0.
    return (dinv_sqrt[:, None] * a * dinv_sqrt[None, :]).astype(jnp.bfloat16)


# ----------------------------------------------------------------------------
# Parameter init (glorot-uniform like GCNConv, zero bias).
# ----------------------------------------------------------------------------
def glorot(key, fan_in, fan_out):
    limit = jnp.sqrt(6.0 / (fan_in + fan_out))
    return jax.random.uniform(
        key, (fan_in, fan_out), jnp.float32, minval=-limit, maxval=limit)


def init_attribute_decoder_params(key, nfeat, nhid):
    k1, k2 = jax.random.split(key)
    return {
        "w1": glorot(k1, nhid, nhid),    # gc1: nhid -> nhid
        "b1": jnp.zeros((nhid,), jnp.float32),
        "w2": glorot(k2, nhid, nfeat),   # gc2: nhid -> nfeat
        "b2": jnp.zeros((nfeat,), jnp.float32),
    }


# ----------------------------------------------------------------------------
# Forward pass of Attribute_Decoder.
# ----------------------------------------------------------------------------
def attribute_decoder_forward(x, edge_index, params, *, tm=512):
    n, f0 = x.shape
    f2 = params["w2"].shape[1]

    # Node axis padded to a multiple of 128 (lane-dense A tiles).  tm (= tk) is
    # forced to a multiple of 128 and divides n_pad evenly.
    n_pad = _round_up(n, 128)
    tm = max(128, _round_up(tm, 128))
    if n_pad <= tm:
        tm = n_pad
    else:
        n_pad = _round_up(n_pad, tm)

    a_p = gcn_normalized_adjacency_padded(edge_index, n, n_pad)   # bf16, padded

    f0p = _round_up(f0, 128)
    x_p = jnp.pad(x, ((0, n_pad - n), (0, f0p - f0))).astype(jnp.bfloat16)

    # Layer 1: hidden activation stays bf16 (MXU operand of layer 2).
    h = _gcn_relu_layer(a_p, x_p, params["w1"], params["b1"],
                        out_dtype=jnp.bfloat16, tm=tm)
    # F.dropout between the layers is the identity at inference.
    # TODO(synk): training-time dropout (pltpu PRNG mask + 1/(1-p) scaling).
    out = _gcn_relu_layer(a_p, h, params["w2"], params["b2"],
                          out_dtype=x.dtype, tm=tm)
    return out[:n, :f2]


# ----------------------------------------------------------------------------
# Pure-JAX f32 reference (same normalization semantics).
# ----------------------------------------------------------------------------
def _reference(x, edge_index, params):
    n = x.shape[0]
    src, tgt = edge_index[0], edge_index[1]
    w = (src != tgt).astype(jnp.float32)
    a = jnp.zeros((n, n), jnp.float32).at[tgt, src].add(w) + jnp.eye(n)
    deg = a.sum(axis=1)
    dinv = jnp.where(deg > 0.0, jax.lax.rsqrt(deg), 0.0)
    a = dinv[:, None] * a * dinv[None, :]
    h = jnp.maximum(a @ (x @ params["w1"]) + params["b1"], 0.0)
    return jnp.maximum(a @ (h @ params["w2"]) + params["b2"], 0.0)


if __name__ == "__main__":
    key = jax.random.PRNGKey(0)
    k_params, k_x = jax.random.split(key)

    N, NHID, NFEAT = 200, 16, 24

    # Deterministic undirected ring graph (both directions), plus one duplicate
    # edge and one explicit self loop to exercise the PyG-matching normalization.
    src = jnp.arange(N, dtype=jnp.int32)
    dst = (src + 1) % N
    ei_src = jnp.concatenate([src, dst, jnp.array([0, 3], jnp.int32)])
    ei_dst = jnp.concatenate([dst, src, jnp.array([1, 3], jnp.int32)])
    edge_index = jnp.stack([ei_src, ei_dst], axis=0)   # [2, 402]

    x = jax.random.normal(k_x, (N, NHID), jnp.float32)
    params = init_attribute_decoder_params(k_params, NFEAT, NHID)

    # Small tm in the demo so n_pad=256 > tm=128 exercises the multi-row-tile
    # and multi-K-tile (accumulator) paths.
    out = attribute_decoder_forward(x, edge_index, params, tm=128)
    out = jax.block_until_ready(out)

    ref = _reference(x, edge_index, params)

    assert out.shape == (N, NFEAT)
    assert bool(jnp.all(out >= 0.0))  # final ReLU
    assert bool(jnp.allclose(out, ref, atol=5e-2, rtol=5e-2)), float(
        jnp.max(jnp.abs(out - ref)))
    print("KERNEL_OK")
</pallas_src>

<mosaic_0001>
module attributes {stable_mosaic.version = 11 : i64} {
  func.func @_gcn_layer_kernel(%arg0: i32, %arg1: i32, %arg2: memref<128x128xbf16, #tpu.memory_space<vmem>>, %arg3: memref<128x128xbf16, #tpu.memory_space<vmem>>, %arg4: memref<128x128xbf16, #tpu.memory_space<vmem>>, %arg5: memref<1x128xf32, #tpu.memory_space<vmem>>, %arg6: memref<128x128xbf16, #tpu.memory_space<vmem>>, %arg7: memref<128x128xf32, #tpu.memory_space<vmem>>) attributes {dimension_semantics = [#tpu.dimension_semantics<parallel>, #tpu.dimension_semantics<arbitrary>], iteration_bounds = array<i64: 2, 2>, scalar_prefetch = 0 : i64, scratch_operands = 1 : i64, tpu.core_type = #tpu.core_type<tc>, window_params = [{transform_indices = @transform_0, window_bounds = array<i64: 128, 128>}, {transform_indices = @transform_1, window_bounds = array<i64: 128, 128>}, {pipeline_mode = #tpu.pipeline_mode<synchronous>, transform_indices = @transform_2, window_bounds = array<i64: 128, 128>}, {pipeline_mode = #tpu.pipeline_mode<synchronous>, transform_indices = @transform_3, window_bounds = array<i64: 1, 128>}, {transform_indices = @transform_4, window_bounds = array<i64: 128, 128>}]} {
    %c0_i32 = arith.constant 0 : i32
    %0 = arith.cmpi eq, %arg1, %c0_i32 : i32
    %1 = arith.extui %0 : i1 to i32
    %c0_i32_0 = arith.constant 0 : i32
    %2 = arith.cmpi ne, %1, %c0_i32_0 : i32
    scf.if %2 {
      %cst_9 = arith.constant 0.000000e+00 : f32
      %12 = vector.broadcast %cst_9 : f32 to vector<128x128xf32>
      %c0_10 = arith.constant 0 : index
      %c0_11 = arith.constant 0 : index
      %13 = vector.load %arg7[%c0_10, %c0_11] : memref<128x128xf32, #tpu.memory_space<vmem>>, vector<128x128xf32>
      tpu.vector_store %arg7[%c0_10, %c0_11], %12 {strides = array<i32>} : memref<128x128xf32, #tpu.memory_space<vmem>>, vector<128x128xf32>,
    } else {
    }
    %c0 = arith.constant 0 : index
    %c0_1 = arith.constant 0 : index
    %3 = vector.load %arg7[%c0, %c0_1] : memref<128x128xf32, #tpu.memory_space<vmem>>, vector<128x128xf32>
    %c0_2 = arith.constant 0 : index
    %c0_3 = arith.constant 0 : index
    %4 = vector.load %arg2[%c0_2, %c0_3] : memref<128x128xbf16, #tpu.memory_space<vmem>>, vector<128x128xbf16>
    %c0_4 = arith.constant 0 : index
    %c0_5 = arith.constant 0 : index
    %5 = vector.load %arg3[%c0_4, %c0_5] : memref<128x128xbf16, #tpu.memory_space<vmem>>, vector<128x128xbf16>
    %cst = arith.constant dense<0.000000e+00> : vector<128x128xf32>
    %6 = tpu.matmul %4, %5, %cst {dimension_numbers = #tpu.dot_dimension_numbers<[1], [0], [0], [1], [0, 0, 1, 1], [], []>} : vector<128x128xbf16>, vector<128x128xbf16>, vector<128x128xf32> -> vector<128x128xf32>
    %7 = arith.addf %3, %6 : vector<128x128xf32>
    %c0_6 = arith.constant 0 : index
    %c0_7 = arith.constant 0 : index
    %8 = vector.load %arg7[%c0_6, %c0_7] : memref<128x128xf32, #tpu.memory_space<vmem>>, vector<128x128xf32>
    tpu.vector_store %arg7[%c0_6, %c0_7], %7 {strides = array<i32>} : memref<128x128xf32, #tpu.memory_space<vmem>>, vector<128x128xf32>,
    %c1_i32 = arith.constant 1 : i32
    %9 = arith.cmpi eq, %arg1, %c1_i32 : i32
    %10 = arith.extui %9 : i1 to i32
    %c0_i32_8 = arith.constant 0 : i32
    %11 = arith.cmpi ne, %10, %c0_i32_8 : i32
    scf.if %11 {
      %c0_9 = arith.constant 0 : index
      %c0_10 = arith.constant 0 : index
      %12 = vector.load %arg7[%c0_9, %c0_10] : memref<128x128xf32, #tpu.memory_space<vmem>>, vector<128x128xf32>
      %13 = arith.truncf %12 : vector<128x128xf32> to vector<128x128xbf16>
      %c0_11 = arith.constant 0 : index
      %c0_12 = arith.constant 0 : index
      %14 = vector.load %arg4[%c0_11, %c0_12] : memref<128x128xbf16, #tpu.memory_space<vmem>>, vector<128x128xbf16>
      %cst_13 = arith.constant dense<0.000000e+00> : vector<128x128xf32>
      %15 = tpu.matmul %13, %14, %cst_13 {dimension_numbers = #tpu.dot_dimension_numbers<[1], [0], [0], [1], [0, 0, 1, 1], [], []>} : vector<128x128xbf16>, vector<128x128xbf16>, vector<128x128xf32> -> vector<128x128xf32>
      %c0_14 = arith.constant 0 : index
      %c0_15 = arith.constant 0 : index
      %16 = vector.load %arg5[%c0_14, %c0_15] : memref<1x128xf32, #tpu.memory_space<vmem>>, vector<1x128xf32>
      %17 = vector.broadcast %16 : vector<1x128xf32> to vector<128x128xf32>
      %18 = arith.addf %15, %17 : vector<128x128xf32>
      %cst_16 = arith.constant 0.000000e+00 : f32
      %19 = vector.broadcast %cst_16 : f32 to vector<128x128xf32>
      %20 = arith.maximumf %18, %19 : vector<128x128xf32>
      %21 = arith.truncf %20 : vector<128x128xf32> to vector<128x128xbf16>
      %c0_17 = arith.constant 0 : index
      %c0_18 = arith.constant 0 : index
      %22 = vector.load %arg6[%c0_17, %c0_18] : memref<128x128xbf16, #tpu.memory_space<vmem>>, vector<128x128xbf16>
      tpu.vector_store %arg6[%c0_17, %c0_18], %21 {strides = array<i32>} : memref<128x128xbf16, #tpu.memory_space<vmem>>, vector<128x128xbf16>,
    } else {
    }
    return
  }
  func.func @transform_0(%arg0: i32, %arg1: i32) -> (i32, i32) {
    %c0_i32 = arith.constant 0 : i32
    return %arg0, %arg1 : i32, i32
  }
  func.func @transform_1(%arg0: i32, %arg1: i32) -> (i32, i32) {
    %c0_i32 = arith.constant 0 : i32
    %c0_i32_0 = arith.constant 0 : i32
    return %arg1, %c0_i32 : i32, i32
  }
  func.func @transform_2(%arg0: i32, %arg1: i32) -> (i32, i32) {
    %c0_i32 = arith.constant 0 : i32
    %c0_i32_0 = arith.constant 0 : i32
    %c0_i32_1 = arith.constant 0 : i32
    return %c0_i32, %c0_i32_0 : i32, i32
  }
  func.func @transform_3(%arg0: i32, %arg1: i32) -> (i32, i32) {
    %c0_i32 = arith.constant 0 : i32
    %c0_i32_0 = arith.constant 0 : i32
    %c0_i32_1 = arith.constant 0 : i32
    return %c0_i32, %c0_i32_0 : i32, i32
  }
  func.func @transform_4(%arg0: i32, %arg1: i32) -> (i32, i32) {
    %c0_i32 = arith.constant 0 : i32
    %c0_i32_0 = arith.constant 0 : i32
    return %arg0, %c0_i32 : i32, i32
  }
}

</mosaic_0001>

<llo_original>
// kernel: tpu_custom_call.1
$region0: #{tpu_custom_call.1}
  #allocation0 [shape = 'u32[]', space=smem, size = 0x4, offset = 0x4, fixed_abs, tag = 'smem constant byte address 0x4 - core index']
  #allocation1 [shape = 'u32[144,128]{1,0:T(1,128)}', space=vmem, size = 0x12000, scoped, tag = 'internal scratch']
  #allocation2 [shape = 'f32[128,128]{1,0:T(8,128)}', space=vmem, size = 0x10000, scoped, tag = 'scratch operand']
  %s0 = inlined_call_operand.hbm [shape: bf16[256,256], index: 0, kind: input, shape index: {}]
  %s1 = inlined_call_operand.hbm [shape: bf16[256,128], index: 1, kind: input, shape index: {}]
  %s2 = inlined_call_operand.hbm [shape: bf16[128,128], index: 2, kind: input, shape index: {}]
  %s3 = inlined_call_operand.vmem [shape: f32[1,128], index: 3, kind: input, shape index: {}]
  %s4 = inlined_call_operand.hbm [shape: bf16[256,128], index: 4, kind: output, shape index: {}]
  %s5 = sld [smem:[#allocation0]]
  $region69: #{tpu_custom_call.1} parent=0
    _
  %s7 = ssub.s32 1, %s5
  %s8 = scalar_select 0, %s7, %s5
  $region1: #{tpu_custom_call.1} parent=0
    #allocation3 [shape = 'u8[65536]{0}', space=vmem, size = 0x10000, scoped, tag = 'input window, operand 0']
    #allocation4 [shape = 's32[2]{0}', space=sflag, size = 0x8, scoped, tag = 'scoped memory for tpu_custom_call.1']
    #allocation5 [shape = 's32[2]{0}', space=sflag, size = 0x8, scoped, tag = 'scoped memory for tpu_custom_call.1']
    #allocation6 [shape = 'u8[65536]{0}', space=vmem, size = 0x10000, scoped, tag = 'input window, operand 1']
    #allocation7 [shape = 's32[2]{0}', space=sflag, size = 0x8, scoped, tag = 'scoped memory for tpu_custom_call.1']
    #allocation8 [shape = 'u8[32768]{0}', space=vmem, size = 0x8000, scoped, tag = 'input window, operand 2, single buffered']
    #allocation9 [shape = 'u8[65536]{0}', space=vmem, size = 0x10000, scoped, tag = 'output window, operand 0']
    %9 = vsyncpa [#allocation4], 0
    %s10 = scalar_lea.sflag [#allocation4], 1
    %11 = vsyncpa %s10, 0
    %12 = vsyncpa [#allocation7], 0
    %s13 = scalar_lea.sflag [#allocation7], 1
    %14 = vsyncpa %s13, 0
    %15 = vsyncpa [#allocation5], 0
    %s16 = scalar_lea.sflag [#allocation5], 1
    %17 = vsyncpa %s16, 0
    loop: start=0, step=1, limit=6
    $region2: #{tpu_custom_call.1} parent=1 // loop_pre_header
      _
    $region3: #{tpu_custom_call.1} parent=1 // loop_header
      %s19 = sphi 0, %s23
      %p20 = scmp.ge.s32.totalorder %s19, 6
      %s26 = sphi 0, %s38
      %s27 = sphi 0, %s34
      %s28 = sphi 0, %s26
      %s29 = sphi 0, %s27
      %s30 = sphi 0, %s28
      %s31 = sphi 0, %s29
      %s43 = sphi 0, %s45
      %s46 = sphi 0, %s43
      %s47 = sphi 0, %s46
      %s63 = sphi 0, %s47
      %s69 = sphi 0, %s71
      %s72 = sphi 0, %s69
      %s73 = sphi 0, %s72
      %s89 = sphi 0, %s73
      %s93 = sphi 0, %s93
      %s95 = sphi 0, %s93
      %s96 = sphi 0, %s95
      %s110 = sphi 0, %s96
      %s114 = sphi 0, %s114
      %s116 = sphi 0, %s114
      %s117 = sphi 0, %s116
      %s131 = sphi 0, %s117
      %s137 = sphi 0, %s139
      %s140 = sphi 0, %s137
      %s141 = sphi 0, %s140
      %s157 = sphi 0, %s141
    $region4: #{tpu_custom_call.1} parent=1 // loop_header_branch
      %22 = sbr.rel (%p20) target = $region8
    $region5: #{tpu_custom_call.1} parent=1 // loop_body
      %s24 = ssub.s32 %s19, 1
      %s25 = ssub.s32 %s19, 2
      %s32 = sadd.s32 1, %s27
      %p33 = scmp.ge.s32.totalorder %s32, 2
      %s34 = scalar_select %p33, 0, %s32
      %s35 = sadd.s32 1, %s26
      %s36 = scalar_select %p33, %s35, %s26
      %p37 = scmp.ge.s32.totalorder %s36, 2
      %s38 = scalar_select %p37, 0, %s36
      %s39 = ssub.s32 %s26, %s38
      %s40 = ssub.s32 %s27, %s34
      %s41 = sor.u32 %s39, %s40
      %p42 = scmp.eq.s32.totalorder %s41, 0
      %s44 = sadd.s32 %s43, 1
      %s45 = scalar_select %p42, %s43, %s44
      %p48 = pneg %p42
      %p49 = scmp.eq.s32.totalorder %s19, 3
      %p50 = por %p48, %p49
      %p51 = scmp.ne.s32.totalorder %s43, %s46
      %p52 = scmp.eq.s32.totalorder %s19, 0
      %p53 = por %p51, %p52
      %p54 = scmp.ne.s32.totalorder %s43, %s46
      %p55 = scmp.eq.s32.totalorder %s24, 3
      %p56 = por %p54, %p55
      %p57 = scmp.ne.s32.totalorder %s46, %s47
      %p58 = scmp.eq.s32.totalorder %s24, 0
      %p59 = por %p57, %p58
      %p60 = scmp.ne.s32.totalorder %s46, %s47
      %p61 = scmp.eq.s32.totalorder %s25, 3
      %p62 = por %p60, %p61
      %p64 = scmp.ne.s32.totalorder %s47, %s63
      %p65 = scmp.eq.s32.totalorder %s25, 0
      %p66 = por %p64, %p65
      %s67 = ssub.s32 %s27, %s34
      %p68 = scmp.eq.s32.totalorder %s67, 0
      %s70 = sadd.s32 %s69, 1
      %s71 = scalar_select %p68, %s69, %s70
      %p74 = pneg %p68
      %p75 = scmp.eq.s32.totalorder %s19, 3
      %p76 = por %p74, %p75
      %p77 = scmp.ne.s32.totalorder %s69, %s72
      %p78 = scmp.eq.s32.totalorder %s19, 0
      %p79 = por %p77, %p78
      %p80 = scmp.ne.s32.totalorder %s69, %s72
      %p81 = scmp.eq.s32.totalorder %s24, 3
      %p82 = por %p80, %p81
      %p83 = scmp.ne.s32.totalorder %s72, %s73
      %p84 = scmp.eq.s32.totalorder %s24, 0
      %p85 = por %p83, %p84
      %p86 = scmp.ne.s32.totalorder %s72, %s73
      %p87 = scmp.eq.s32.totalorder %s25, 3
      %p88 = por %p86, %p87
      %p90 = scmp.ne.s32.totalorder %s73, %s89
      %p91 = scmp.eq.s32.totalorder %s25, 0
      %p92 = por %p90, %p91
      %s94 = sadd.s32 %s93, 1
      %p97 = scmp.eq.s32.totalorder %s19, 3
      %p98 = scmp.ne.s32.totalorder %s93, %s95
      %p99 = scmp.eq.s32.totalorder %s19, 0
      %p100 = por %p98, %p99
      %p101 = scmp.ne.s32.totalorder %s93, %s95
      %p102 = scmp.eq.s32.totalorder %s24, 3
      %p103 = por %p101, %p102
      %p104 = scmp.ne.s32.totalorder %s95, %s96
      %p105 = scmp.eq.s32.totalorder %s24, 0
      %p106 = por %p104, %p105
      %p107 = scmp.ne.s32.totalorder %s95, %s96
      %p108 = scmp.eq.s32.totalorder %s25, 3
      %p109 = por %p107, %p108
      %p111 = scmp.ne.s32.totalorder %s96, %s110
      %p112 = scmp.eq.s32.totalorder %s25, 0
      %p113 = por %p111, %p112
      %s115 = sadd.s32 %s114, 1
      %p118 = scmp.eq.s32.totalorder %s19, 3
      %p119 = scmp.ne.s32.totalorder %s114, %s116
      %p120 = scmp.eq.s32.totalorder %s19, 0
      %p121 = por %p119, %p120
      %p122 = scmp.ne.s32.totalorder %s114, %s116
      %p123 = scmp.eq.s32.totalorder %s24, 3
      %p124 = por %p122, %p123
      %p125 = scmp.ne.s32.totalorder %s116, %s117
      %p126 = scmp.eq.s32.totalorder %s24, 0
      %p127 = por %p125, %p126
      %p128 = scmp.ne.s32.totalorder %s116, %s117
      %p129 = scmp.eq.s32.totalorder %s25, 3
      %p130 = por %p128, %p129
      %p132 = scmp.ne.s32.totalorder %s117, %s131
      %p133 = scmp.eq.s32.totalorder %s25, 0
      %p134 = por %p132, %p133
      %s135 = ssub.s32 %s26, %s38
      %p136 = scmp.eq.s32.totalorder %s135, 0
      %s138 = sadd.s32 %s137, 1
      %s139 = scalar_select %p136, %s137, %s138
      %p142 = pneg %p136
      %p143 = scmp.eq.s32.totalorder %s19, 3
      %p144 = por %p142, %p143
      %p145 = scmp.ne.s32.totalorder %s137, %s140
      %p146 = scmp.eq.s32.totalorder %s19, 0
      %p147 = por %p145, %p146
      %p148 = scmp.ne.s32.totalorder %s137, %s140
      %p149 = scmp.eq.s32.totalorder %s24, 3
      %p150 = por %p148, %p149
      %p151 = scmp.ne.s32.totalorder %s140, %s141
      %p152 = scmp.eq.s32.totalorder %s24, 0
      %p153 = por %p151, %p152
      %p154 = scmp.ne.s32.totalorder %s140, %s141
      %p155 = scmp.eq.s32.totalorder %s25, 3
      %p156 = por %p154, %p155
      %p158 = scmp.ne.s32.totalorder %s141, %s157
      %p159 = scmp.eq.s32.totalorder %s25, 0
      %p160 = por %p158, %p159
      %p161 = scmp.le.s32.totalorder 1, %s19
      %p162 = scmp.lt.s32.totalorder %s19, 5
      %p163 = pnand %p161, %p162
      %p164 = pneg %p163
      // Predicated region
      $region9: #{tpu_custom_call.1} parent=5 // pred_check
        _
      $region10: #{tpu_custom_call.1} parent=5 // pred_check_branch
        %166 = sbr.rel (%p163) target = $region12
      $region11: #{tpu_custom_call.1} parent=5 // pred_region
        %s167 = ssub.s32 %s19, 1
        // Predicated region
        $region13: #{tpu_custom_call.1} parent=11 // pred_check
          %p168 = pneg %p106
        $region14: #{tpu_custom_call.1} parent=11 // pred_check_branch
          %170 = sbr.rel (%p168) target = $region16
        $region15: #{tpu_custom_call.1} parent=11 // pred_region
          %s172 = ssub.s32 1024, 1024
          %173 = vsyncadd [#allocation7], %s172
          %s174 = sshll.u32 [#allocation8], 4
          %s175 = int_to_ptr.vmem [resolvable:$true] %s174
          %180 = dma.hbm_to_vmem [thread:$0]  %s2, 1024, %s175, [#allocation7], 64, 64, 4
        $region16: #{tpu_custom_call.1} parent=11 // pred_fallthru
          _
        // Predicated region
        $region17: #{tpu_custom_call.1} parent=11 // pred_check
          %p181 = pneg %p127
        $region18: #{tpu_custom_call.1} parent=11 // pred_check_branch
          %183 = sbr.rel (%p181) target = $region20
        $region19: #{tpu_custom_call.1} parent=11 // pred_region
          _
        $region20: #{tpu_custom_call.1} parent=11 // pred_fallthru
          _
      $region12: #{tpu_custom_call.1} parent=5 // pred_fallthru
        _
      %p184 = scmp.lt.s32.totalorder %s19, 4
      // Predicated region
      $region21: #{tpu_custom_call.1} parent=5 // pred_check
        %p185 = pneg %p184
      $region22: #{tpu_custom_call.1} parent=5 // pred_check_branch
        %187 = sbr.rel (%p185) target = $region24
      $region23: #{tpu_custom_call.1} parent=5 // pred_region
        // Predicated region
        $region25: #{tpu_custom_call.1} parent=23 // pred_check
          %p188 = pneg %p53
        $region26: #{tpu_custom_call.1} parent=23 // pred_check_branch
          %190 = sbr.rel (%p188) target = $region28
        $region27: #{tpu_custom_call.1} parent=23 // pred_region
          %s191 = sand.u32 %s43, 1
          %s192 = scalar_lea.sflag [#allocation4], %s191
          %s193 = sand.u32 %s43, 1
          %s194 = smul.addr %s193, 64
          %s195 = scalar_lea.vmem [#allocation3], %s194
          %s196 = smul.u32 16, %s26
          %s198 = ssub.s32 1024, 1024
          %199 = vsyncadd %s192, %s198
          %s200 = smul.addr %s196, 2
          %s201 = sadd.s32 %s27, %s200
          %s202 = smul.addr %s201, 64
          %s203 = scalar_lea.hbm %s0, %s202
          %s204 = sshll.u32 %s195, 4
          %s205 = int_to_ptr.vmem [resolvable:$true] %s204
          %210 = dma.hbm_to_vmem [thread:$0]  %s203, 1024, %s205, %s192, 128, 64, 4
        $region28: #{tpu_custom_call.1} parent=23 // pred_fallthru
          _
        // Predicated region
        $region29: #{tpu_custom_call.1} parent=23 // pred_check
          %p211 = pneg %p79
        $region30: #{tpu_custom_call.1} parent=23 // pred_check_branch
          %213 = sbr.rel (%p211) target = $region32
        $region31: #{tpu_custom_call.1} parent=23 // pred_region
          %s214 = sand.u32 %s19, 1
          %s215 = scalar_lea.sflag [#allocation7], %s214
          %s216 = sand.u32 %s69, 1
          %s217 = smul.addr %s216, 64
          %s218 = scalar_lea.vmem [#allocation6], %s217
          %s219 = smul.u32 16, %s27
          %s221 = ssub.s32 1024, 1024
          %222 = vsyncadd %s215, %s221
          %s223 = smul.addr %s219, 64
          %s224 = scalar_lea.hbm %s1, %s223
          %s225 = sshll.u32 %s218, 4
          %s226 = int_to_ptr.vmem [resolvable:$true] %s225
          %231 = dma.hbm_to_vmem [thread:$0]  %s224, 1024, %s226, %s215, 64, 64, 4
        $region32: #{tpu_custom_call.1} parent=23 // pred_fallthru
          _
      $region24: #{tpu_custom_call.1} parent=5 // pred_fallthru
        _
      %p232 = scmp.le.s32.totalorder 1, %s19
      %p233 = scmp.lt.s32.totalorder %s19, 5
      %p234 = pnand %p232, %p233
      %p235 = pneg %p234
      // Predicated region
      $region33: #{tpu_custom_call.1} parent=5 // pred_check
        _
      $region34: #{tpu_custom_call.1} parent=5 // pred_check_branch
        %237 = sbr.rel (%p234) target = $region36
      $region35: #{tpu_custom_call.1} parent=5 // pred_region
        %s238 = ssub.s32 %s19, 1
        %s239 = sand.u32 %s46, 1
        %s240 = scalar_lea.sflag [#allocation4], %s239
        %s241 = sand.u32 %s46, 1
        %s242 = smul.addr %s241, 64
        %s243 = scalar_lea.vmem [#allocation3], %s242
        // Predicated region
        $region37: #{tpu_custom_call.1} parent=35 // pred_check
          %p244 = pneg %p59
        $region38: #{tpu_custom_call.1} parent=35 // pred_check_branch
          %246 = sbr.rel (%p244) target = $region40
        $region39: #{tpu_custom_call.1} parent=35 // pred_region
          %247 = dma.done %s240, 1024
        $region40: #{tpu_custom_call.1} parent=35 // pred_fallthru
          _
        %s248 = sand.u32 %s24, 1
        %s249 = scalar_lea.sflag [#allocation7], %s248
        %s250 = sand.u32 %s72, 1
        %s251 = smul.addr %s250, 64
        %s252 = scalar_lea.vmem [#allocation6], %s251
        // Predicated region
        $region41: #{tpu_custom_call.1} parent=35 // pred_check
          %p253 = pneg %p85
        $region42: #{tpu_custom_call.1} parent=35 // pred_check_branch
          %255 = sbr.rel (%p253) target = $region44
        $region43: #{tpu_custom_call.1} parent=35 // pred_region
          %256 = dma.done %s249, 1024
        $region44: #{tpu_custom_call.1} parent=35 // pred_fallthru
          _
        // Predicated region
        $region45: #{tpu_custom_call.1} parent=35 // pred_check
          %p257 = pneg %p106
        $region46: #{tpu_custom_call.1} parent=35 // pred_check_branch
          %259 = sbr.rel (%p257) target = $region48
        $region47: #{tpu_custom_call.1} parent=35 // pred_region
          %260 = dma.done [#allocation7], 1024
        $region48: #{tpu_custom_call.1} parent=35 // pred_fallthru
          _
        %s261 = sand.u32 %s46, 1
        %s262 = scalar_lea.sflag [#allocation4], %s261
        %s263 = sand.u32 %s46, 1
        %s264 = smul.addr %s263, 64
        %s265 = scalar_lea.vmem [#allocation3], %s264
        %p266 = pneg %p59
        %p267 = pneg %p56
        %s268 = sand.u32 %s24, 1
        %s269 = scalar_lea.sflag [#allocation7], %s268
        %s270 = sand.u32 %s72, 1
        %s271 = smul.addr %s270, 64
        %s272 = scalar_lea.vmem [#allocation6], %s271
        %p273 = pneg %p85
        %p274 = pneg %p82
        %p275 = pneg %p106
        %p276 = pneg %p103
        %p277 = pneg %p127
        %p278 = pneg %p124
        %p279 = pneg %p153
        %p280 = pneg %p150
        %s281 = sand.u32 %s140, 1
        %s282 = scalar_lea.sflag [#allocation5], %s281
        %s283 = sand.u32 %s140, 1
        %s284 = smul.addr %s283, 64
        %s285 = scalar_lea.vmem [#allocation9], %s284
        %s286 = smul.u32 16, %s28
        %s287 = smul.u32 16, %s29
        %s288 = smul.u32 16, %s28
        %p290 = scmp.eq.s32.totalorder %s29, 0
        // Predicated region
        $region49: #{tpu_custom_call.1} parent=35 // pred_check
          %p291 = pneg %p290
        $region50: #{tpu_custom_call.1} parent=35 // pred_check_branch
          %293 = sbr.rel (%p291) target = $region52
        $region51: #{tpu_custom_call.1} parent=35 // pred_region
          %294 = vst [vmem:[#allocation2] sm:$0xff] 0.0
          %295 = vst [vmem:[#allocation2 + $0x8] sm:$0xff] 0.0
          %296 = vst [vmem:[#allocation2 + $0x10] sm:$0xff] 0.0
          %297 = vst [vmem:[#allocation2 + $0x18] sm:$0xff] 0.0
          %298 = vst [vmem:[#allocation2 + $0x20] sm:$0xff] 0.0
          %299 = vst [vmem:[#allocation2 + $0x28] sm:$0xff] 0.0
          %300 = vst [vmem:[#allocation2 + $0x30] sm:$0xff] 0.0
          %301 = vst [vmem:[#allocation2 + $0x38] sm:$0xff] 0.0
          %302 = vst [vmem:[#allocation2 + $0x40] sm:$0xff] 0.0
          %303 = vst [vmem:[#allocation2 + $0x48] sm:$0xff] 0.0
          %304 = vst [vmem:[#allocation2 + $0x50] sm:$0xff] 0.0
          %305 = vst [vmem:[#allocation2 + $0x58] sm:$0xff] 0.0
          %306 = vst [vmem:[#allocation2 + $0x60] sm:$0xff] 0.0
          %307 = vst [vmem:[#allocation2 + $0x68] sm:$0xff] 0.0
          %308 = vst [vmem:[#allocation2 + $0x70] sm:$0xff] 0.0
          %309 = vst [vmem:[#allocation2 + $0x78] sm:$0xff] 0.0
        $region52: #{tpu_custom_call.1} parent=35 // pred_fallthru
          _
        %v310 = vld [vmem:[#allocation2] sm:$0xff]
        %v311 = vld [vmem:[#allocation2 + $0x8] sm:$0xff]
        %v312 = vld [vmem:[#allocation2 + $0x10] sm:$0xff]
        %v313 = vld [vmem:[#allocation2 + $0x18] sm:$0xff]
        %v314 = vld [vmem:[#allocation2 + $0x20] sm:$0xff]
        %v315 = vld [vmem:[#allocation2 + $0x28] sm:$0xff]
        %v316 = vld [vmem:[#allocation2 + $0x30] sm:$0xff]
        %v317 = vld [vmem:[#allocation2 + $0x38] sm:$0xff]
        %v318 = vld [vmem:[#allocation2 + $0x40] sm:$0xff]
        %v319 = vld [vmem:[#allocation2 + $0x48] sm:$0xff]
        %v320 = vld [vmem:[#allocation2 + $0x50] sm:$0xff]
        %v321 = vld [vmem:[#allocation2 + $0x58] sm:$0xff]
        %v322 = vld [vmem:[#allocation2 + $0x60] sm:$0xff]
        %v323 = vld [vmem:[#allocation2 + $0x68] sm:$0xff]
        %v324 = vld [vmem:[#allocation2 + $0x70] sm:$0xff]
        %v325 = vld [vmem:[#allocation2 + $0x78] sm:$0xff]
        %v326 = vld [vmem:[%s243] sm:$0xf]
        %v327 = vld [vmem:[%s243 + $0x4] sm:$0xf]
        %v328 = vld [vmem:[%s243 + $0x8] sm:$0xf]
        %v329 = vld [vmem:[%s243 + $0xc] sm:$0xf]
        %v330 = vld [vmem:[%s243 + $0x10] sm:$0xf]
        %v331 = vld [vmem:[%s243 + $0x14] sm:$0xf]
        %v332 = vld [vmem:[%s243 + $0x18] sm:$0xf]
        %v333 = vld [vmem:[%s243 + $0x1c] sm:$0xf]
        %v334 = vld [vmem:[%s243 + $0x20] sm:$0xf]
        %v335 = vld [vmem:[%s243 + $0x24] sm:$0xf]
        %v336 = vld [vmem:[%s243 + $0x28] sm:$0xf]
        %v337 = vld [vmem:[%s243 + $0x2c] sm:$0xf]
        %v338 = vld [vmem:[%s243 + $0x30] sm:$0xf]
        %v339 = vld [vmem:[%s243 + $0x34] sm:$0xf]
        %v340 = vld [vmem:[%s243 + $0x38] sm:$0xf]
        %v341 = vld [vmem:[%s243 + $0x3c] sm:$0xf]
        %v342 = vld [vmem:[%s252] sm:$0xf]
        %v343 = vld [vmem:[%s252 + $0x4] sm:$0xf]
        %v344 = vld [vmem:[%s252 + $0x8] sm:$0xf]
        %v345 = vld [vmem:[%s252 + $0xc] sm:$0xf]
        %v346 = vld [vmem:[%s252 + $0x10] sm:$0xf]
        %v347 = vld [vmem:[%s252 + $0x14] sm:$0xf]
        %v348 = vld [vmem:[%s252 + $0x18] sm:$0xf]
        %v349 = vld [vmem:[%s252 + $0x1c] sm:$0xf]
        %v350 = vld [vmem:[%s252 + $0x20] sm:$0xf]
        %v351 = vld [vmem:[%s252 + $0x24] sm:$0xf]
        %v352 = vld [vmem:[%s252 + $0x28] sm:$0xf]
        %v353 = vld [vmem:[%s252 + $0x2c] sm:$0xf]
        %v354 = vld [vmem:[%s252 + $0x30] sm:$0xf]
        %v355 = vld [vmem:[%s252 + $0x34] sm:$0xf]
        %v356 = vld [vmem:[%s252 + $0x38] sm:$0xf]
        %v357 = vld [vmem:[%s252 + $0x3c] sm:$0xf]
        %v374 = vunpack.c.l.b16 %v326
        %v375 = vunpack.c.l.b16 %v327
        %v376 = vunpack.c.l.b16 %v328
        %v377 = vunpack.c.l.b16 %v329
        %v378 = vunpack.c.l.b16 %v330
        %v379 = vunpack.c.l.b16 %v331
        %v380 = vunpack.c.l.b16 %v332
        %v381 = vunpack.c.l.b16 %v333
        %v382 = vunpack.c.l.b16 %v334
        %v383 = vunpack.c.l.b16 %v335
        %v384 = vunpack.c.l.b16 %v336
        %v385 = vunpack.c.l.b16 %v337
        %v386 = vunpack.c.l.b16 %v338
        %v387 = vunpack.c.l.b16 %v339
        %v388 = vunpack.c.l.b16 %v340
        %v389 = vunpack.c.l.b16 %v341
        %v390 = vpack.c.b16 %v375, %v374
        %v391 = vpack.c.b16 %v377, %v376
        %v392 = vpack.c.b16 %v379, %v378
        %v393 = vpack.c.b16 %v381, %v380
        %v394 = vpack.c.b16 %v383, %v382
        %v395 = vpack.c.b16 %v385, %v384
        %v396 = vpack.c.b16 %v387, %v386
        %v397 = vpack.c.b16 %v389, %v388
        %v422 = vunpack.c.l.b16 %v342
        %v423 = vunpack.c.l.b16 %v343
        %v424 = vunpack.c.l.b16 %v344
        %v425 = vunpack.c.l.b16 %v345
        %v426 = vunpack.c.l.b16 %v346
        %v427 = vunpack.c.l.b16 %v347
        %v428 = vunpack.c.l.b16 %v348
        %v429 = vunpack.c.l.b16 %v349
        %v430 = vunpack.c.l.b16 %v350
        %v431 = vunpack.c.l.b16 %v351
        %v432 = vunpack.c.l.b16 %v352
        %v433 = vunpack.c.l.b16 %v353
        %v434 = vunpack.c.l.b16 %v354
        %v435 = vunpack.c.l.b16 %v355
        %v436 = vunpack.c.l.b16 %v356
        %v437 = vunpack.c.l.b16 %v357
        %v438 = vpack.c.b16 %v423, %v422
        %v439 = vpack.c.b16 %v425, %v424
        %v440 = vpack.c.b16 %v427, %v426
        %v441 = vpack.c.b16 %v429, %v428
        %v442 = vpack.c.b16 %v431, %v430
        %v443 = vpack.c.b16 %v433, %v432
        %v444 = vpack.c.b16 %v435, %v434
        %v445 = vpack.c.b16 %v437, %v436
        %454 = vmatprep.subr.bf16.mxu0 0
        %455 = vmatpush1.bf16.msra.mxu0 %v438
        %456 = vmatprep.subr.bf16.mxu0 0
        %457 = vmatpush1.bf16.msra.mxu0 %v439
        %458 = vmatprep.subr.bf16.mxu0 0
        %459 = vmatpush1.bf16.msra.mxu0 %v440
        %460 = vmatprep.subr.bf16.mxu0 0
        %461 = vmatpush1.bf16.msra.mxu0 %v441
        %462 = vmatprep.subr.bf16.mxu0 0
        %463 = vmatpush1.bf16.msra.mxu0 %v442
        %464 = vmatprep.subr.bf16.mxu0 0
        %465 = vmatpush1.bf16.msra.mxu0 %v443
        %466 = vmatprep.subr.bf16.mxu0 0
        %467 = vmatpush1.bf16.msra.mxu0 %v444
        %468 = vmatprep.subr.bf16.mxu0 0
        %469 = vmatpush1.bf16.msra.mxu0 %v445
        %470 = vmatprep.subr.bf16.mxu0 0
        %471 = vmatpush1.bf16.msra.mxu0 0
        %472 = vmatprep.subr.bf16.mxu0 0
        %473 = vmatpush1.bf16.msra.mxu0 0
        %474 = vmatprep.subr.bf16.mxu0 0
        %475 = vmatpush1.bf16.msra.mxu0 0
        %476 = vmatprep.subr.bf16.mxu0 0
        %477 = vmatpush1.bf16.msra.mxu0 0
        %478 = vmatprep.subr.bf16.mxu0 0
        %479 = vmatpush1.bf16.msra.mxu0 0
        %480 = vmatprep.subr.bf16.mxu0 0
        %481 = vmatpush1.bf16.msra.mxu0 0
        %482 = vmatprep.subr.bf16.mxu0 0
        %483 = vmatpush1.bf16.msra.mxu0 0
        %484 = vmatprep.subr.bf16.mxu0 0
        %485 = vmatpush1.bf16.msra.mxu0 0
        %486 = vmatprep.mubr.bf16.mxu0 0
        %487 = vmatmul.mubr.bf16.gmra.mrb[0].mxu0 %v390
        %v488 = vpop.f32.mrb[0].mxu0
        %v489 = vadd.f32 0.0, %v488
        %v490 = vpop.f32.mrb[0].mxu0
        %v491 = vpop.f32.mrb[0].mxu0
        %v492 = vadd.f32 0.0, %v491
        %v493 = vpop.f32.mrb[0].mxu0
        %494 = vmatprep.mubr.bf16.mxu0 0
        %495 = vmatmul.mubr.bf16.gmra.mrb[0].mxu0 %v391
        %v496 = vpop.f32.mrb[0].mxu0
        %v497 = vadd.f32 0.0, %v496
        %v498 = vpop.f32.mrb[0].mxu0
        %v499 = vpop.f32.mrb[0].mxu0
        %v500 = vadd.f32 0.0, %v499
        %v501 = vpop.f32.mrb[0].mxu0
        %502 = vmatprep.mubr.bf16.mxu0 0
        %503 = vmatmul.mubr.bf16.gmra.mrb[0].mxu0 %v392
        %v504 = vpop.f32.mrb[0].mxu0
        %v505 = vadd.f32 0.0, %v504
        %v506 = vpop.f32.mrb[0].mxu0
        %v507 = vpop.f32.mrb[0].mxu0
        %v508 = vadd.f32 0.0, %v507
        %v509 = vpop.f32.mrb[0].mxu0
        %510 = vmatprep.mubr.bf16.mxu0 0
        %511 = vmatmul.mubr.bf16.gmra.mrb[0].mxu0 %v393
        %v512 = vpop.f32.mrb[0].mxu0
        %v513 = vadd.f32 0.0, %v512
        %v514 = vpop.f32.mrb[0].mxu0
        %v515 = vpop.f32.mrb[0].mxu0
        %v516 = vadd.f32 0.0, %v515
        %v517 = vpop.f32.mrb[0].mxu0
        %518 = vmatprep.mubr.bf16.mxu0 0
        %519 = vmatmul.mubr.bf16.gmra.mrb[0].mxu0 %v394
        %v520 = vpop.f32.mrb[0].mxu0
        %v521 = vadd.f32 0.0, %v520
        %v522 = vpop.f32.mrb[0].mxu0
        %v523 = vpop.f32.mrb[0].mxu0
        %v524 = vadd.f32 0.0, %v523
        %v525 = vpop.f32.mrb[0].mxu0
        %526 = vmatprep.mubr.bf16.mxu0 0
        %527 = vmatmul.mubr.bf16.gmra.mrb[0].mxu0 %v395
        %v528 = vpop.f32.mrb[0].mxu0
        %v529 = vadd.f32 0.0, %v528
        %v530 = vpop.f32.mrb[0].mxu0
        %v531 = vpop.f32.mrb[0].mxu0
        %v532 = vadd.f32 0.0, %v531
        %v533 = vpop.f32.mrb[0].mxu0
        %534 = vmatprep.mubr.bf16.mxu0 0
        %535 = vmatmul.mubr.bf16.gmra.mrb[0].mxu0 %v396
        %v536 = vpop.f32.mrb[0].mxu0
        %v537 = vadd.f32 0.0, %v536
        %v538 = vpop.f32.mrb[0].mxu0
        %v539 = vpop.f32.mrb[0].mxu0
        %v540 = vadd.f32 0.0, %v539
        %v541 = vpop.f32.mrb[0].mxu0
        %542 = vmatprep.mubr.bf16.mxu0 0
        %543 = vmatmul.mubr.bf16.gmra.mrb[0].mxu0 %v397
        %v544 = vpop.f32.mrb[0].mxu0
        %v545 = vadd.f32 0.0, %v544
        %v546 = vpop.f32.mrb[0].mxu0
        %v547 = vpop.f32.mrb[0].mxu0
        %v548 = vadd.f32 0.0, %v547
        %v549 = vpop.f32.mrb[0].mxu0
        %550 = vdwg.mxu0
        %v551 = vadd.f32 %v310, %v489
        %v552 = vadd.f32 %v311, %v492
        %v553 = vadd.f32 %v312, %v497
        %v554 = vadd.f32 %v313, %v500
        %v555 = vadd.f32 %v314, %v505
        %v556 = vadd.f32 %v315, %v508
        %v557 = vadd.f32 %v316, %v513
        %v558 = vadd.f32 %v317, %v516
        %v559 = vadd.f32 %v318, %v521
        %v560 = vadd.f32 %v319, %v524
        %v561 = vadd.f32 %v320, %v529
        %v562 = vadd.f32 %v321, %v532
        %v563 = vadd.f32 %v322, %v537
        %v564 = vadd.f32 %v323, %v540
        %v565 = vadd.f32 %v324, %v545
        %v566 = vadd.f32 %v325, %v548
        %567 = vst [vmem:[#allocation2] sm:$0xff] %v551
        %568 = vst [vmem:[#allocation2 + $0x8] sm:$0xff] %v552
        %569 = vst [vmem:[#allocation2 + $0x10] sm:$0xff] %v553
        %570 = vst [vmem:[#allocation2 + $0x18] sm:$0xff] %v554
        %571 = vst [vmem:[#allocation2 + $0x20] sm:$0xff] %v555
        %572 = vst [vmem:[#allocation2 + $0x28] sm:$0xff] %v556
        %573 = vst [vmem:[#allocation2 + $0x30] sm:$0xff] %v557
        %574 = vst [vmem:[#allocation2 + $0x38] sm:$0xff] %v558
        %575 = vst [vmem:[#allocation2 + $0x40] sm:$0xff] %v559
        %576 = vst [vmem:[#allocation2 + $0x48] sm:$0xff] %v560
        %577 = vst [vmem:[#allocation2 + $0x50] sm:$0xff] %v561
        %578 = vst [vmem:[#allocation2 + $0x58] sm:$0xff] %v562
        %579 = vst [vmem:[#allocation2 + $0x60] sm:$0xff] %v563
        %580 = vst [vmem:[#allocation2 + $0x68] sm:$0xff] %v564
        %581 = vst [vmem:[#allocation2 + $0x70] sm:$0xff] %v565
        %582 = vst [vmem:[#allocation2 + $0x78] sm:$0xff] %v566
        %p583 = scmp.eq.s32.totalorder %s29, 1
        // Predicated region
        $region53: #{tpu_custom_call.1} parent=35 // pred_check
          %p584 = pneg %p583
        $region54: #{tpu_custom_call.1} parent=35 // pred_check_branch
          %586 = sbr.rel (%p584) target = $region56
        $region55: #{tpu_custom_call.1} parent=35 // pred_region
          %v587 = vld [vmem:[#allocation2] sm:$0xff]
          %v588 = vld [vmem:[#allocation2 + $0x8] sm:$0xff]
          %v589 = vld [vmem:[#allocation2 + $0x10] sm:$0xff]
          %v590 = vld [vmem:[#allocation2 + $0x18] sm:$0xff]
          %v591 = vld [vmem:[#allocation2 + $0x20] sm:$0xff]
          %v592 = vld [vmem:[#allocation2 + $0x28] sm:$0xff]
          %v593 = vld [vmem:[#allocation2 + $0x30] sm:$0xff]
          %v594 = vld [vmem:[#allocation2 + $0x38] sm:$0xff]
          %v595 = vld [vmem:[#allocation2 + $0x40] sm:$0xff]
          %v596 = vld [vmem:[#allocation2 + $0x48] sm:$0xff]
          %v597 = vld [vmem:[#allocation2 + $0x50] sm:$0xff]
          %v598 = vld [vmem:[#allocation2 + $0x58] sm:$0xff]
          %v599 = vld [vmem:[#allocation2 + $0x60] sm:$0xff]
          %v600 = vld [vmem:[#allocation2 + $0x68] sm:$0xff]
          %v601 = vld [vmem:[#allocation2 + $0x70] sm:$0xff]
          %v602 = vld [vmem:[#allocation2 + $0x78] sm:$0xff]
          %v603 = vpack.c.bf16 %v588, %v587
          %v604 = vpack.c.bf16 %v590, %v589
          %v605 = vpack.c.bf16 %v592, %v591
          %v606 = vpack.c.bf16 %v594, %v593
          %v607 = vpack.c.bf16 %v596, %v595
          %v608 = vpack.c.bf16 %v598, %v597
          %v609 = vpack.c.bf16 %v600, %v599
          %v610 = vpack.c.bf16 %v602, %v601
          %v611 = vld [vmem:[#allocation8] sm:$0xf]
          %v612 = vld [vmem:[#allocation8 + $0x4] sm:$0xf]
          %v613 = vld [vmem:[#allocation8 + $0x8] sm:$0xf]
          %v614 = vld [vmem:[#allocation8 + $0xc] sm:$0xf]
          %v615 = vld [vmem:[#allocation8 + $0x10] sm:$0xf]
          %v616 = vld [vmem:[#allocation8 + $0x14] sm:$0xf]
          %v617 = vld [vmem:[#allocation8 + $0x18] sm:$0xf]
          %v618 = vld [vmem:[#allocation8 + $0x1c] sm:$0xf]
          %v619 = vld [vmem:[#allocation8 + $0x20] sm:$0xf]
          %v620 = vld [vmem:[#allocation8 + $0x24] sm:$0xf]
          %v621 = vld [vmem:[#allocation8 + $0x28] sm:$0xf]
          %v622 = vld [vmem:[#allocation8 + $0x2c] sm:$0xf]
          %v623 = vld [vmem:[#allocation8 + $0x30] sm:$0xf]
          %v624 = vld [vmem:[#allocation8 + $0x34] sm:$0xf]
          %v625 = vld [vmem:[#allocation8 + $0x38] sm:$0xf]
          %v626 = vld [vmem:[#allocation8 + $0x3c] sm:$0xf]
          %v627 = vld [vmem:[%s3] sm:$0x1]
          %v629 = vlaneseq
          %v630 = vshrl.u32 %v629, 7
          %v631 = vsub.s32 0, %v630
          %v632 = vrot.slane %v627, %v631
          %v650 = vunpack.c.l.b16 %v611
          %v651 = vunpack.c.l.b16 %v612
          %v652 = vunpack.c.l.b16 %v613
          %v653 = vunpack.c.l.b16 %v614
          %v654 = vunpack.c.l.b16 %v615
          %v655 = vunpack.c.l.b16 %v616
          %v656 = vunpack.c.l.b16 %v617
          %v657 = vunpack.c.l.b16 %v618
          %v658 = vunpack.c.l.b16 %v619
          %v659 = vunpack.c.l.b16 %v620
          %v660 = vunpack.c.l.b16 %v621
          %v661 = vunpack.c.l.b16 %v622
          %v662 = vunpack.c.l.b16 %v623
          %v663 = vunpack.c.l.b16 %v624
          %v664 = vunpack.c.l.b16 %v625
          %v665 = vunpack.c.l.b16 %v626
          %v666 = vpack.c.b16 %v651, %v650
          %v667 = vpack.c.b16 %v653, %v652
          %v668 = vpack.c.b16 %v655, %v654
          %v669 = vpack.c.b16 %v657, %v656
          %v670 = vpack.c.b16 %v659, %v658
          %v671 = vpack.c.b16 %v661, %v660
          %v672 = vpack.c.b16 %v663, %v662
          %v673 = vpack.c.b16 %v665, %v664
          %682 = vmatprep.subr.bf16.mxu0 0
          %683 = vmatpush1.bf16.msra.mxu0 %v666
          %684 = vmatprep.subr.bf16.mxu0 0
          %685 = vmatpush1.bf16.msra.mxu0 %v667
          %686 = vmatprep.subr.bf16.mxu0 0
          %687 = vmatpush1.bf16.msra.mxu0 %v668
          %688 = vmatprep.subr.bf16.mxu0 0
          %689 = vmatpush1.bf16.msra.mxu0 %v669
          %690 = vmatprep.subr.bf16.mxu0 0
          %691 = vmatpush1.bf16.msra.mxu0 %v670
          %692 = vmatprep.subr.bf16.mxu0 0
          %693 = vmatpush1.bf16.msra.mxu0 %v671
          %694 = vmatprep.subr.bf16.mxu0 0
          %695 = vmatpush1.bf16.msra.mxu0 %v672
          %696 = vmatprep.subr.bf16.mxu0 0
          %697 = vmatpush1.bf16.msra.mxu0 %v673
          %698 = vmatprep.subr.bf16.mxu0 0
          %699 = vmatpush1.bf16.msra.mxu0 0
          %700 = vmatprep.subr.bf16.mxu0 0
          %701 = vmatpush1.bf16.msra.mxu0 0
          %702 = vmatprep.subr.bf16.mxu0 0
          %703 = vmatpush1.bf16.msra.mxu0 0
          %704 = vmatprep.subr.bf16.mxu0 0
          %705 = vmatpush1.bf16.msra.mxu0 0
          %706 = vmatprep.subr.bf16.mxu0 0
          %707 = vmatpush1.bf16.msra.mxu0 0
          %708 = vmatprep.subr.bf16.mxu0 0
          %709 = vmatpush1.bf16.msra.mxu0 0
          %710 = vmatprep.subr.bf16.mxu0 0
          %711 = vmatpush1.bf16.msra.mxu0 0
          %712 = vmatprep.subr.bf16.mxu0 0
          %713 = vmatpush1.bf16.msra.mxu0 0
          %714 = vmatprep.mubr.bf16.mxu0 0
          %715 = vmatmul.mubr.bf16.gmra.mrb[0].mxu0 %v603
          %v716 = vpop.f32.mrb[0].mxu0
          %v717 = vadd.f32 %v632, %v716
          %v718 = vpop.f32.mrb[0].mxu0
          %v719 = vpop.f32.mrb[0].mxu0
          %v720 = vadd.f32 %v632, %v719
          %v721 = vpop.f32.mrb[0].mxu0
          %722 = vmatprep.mubr.bf16.mxu0 0
          %723 = vmatmul.mubr.bf16.gmra.mrb[0].mxu0 %v604
          %v724 = vpop.f32.mrb[0].mxu0
          %v725 = vadd.f32 %v632, %v724
          %v726 = vpop.f32.mrb[0].mxu0
          %v727 = vpop.f32.mrb[0].mxu0
          %v728 = vadd.f32 %v632, %v727
          %v729 = vpop.f32.mrb[0].mxu0
          %730 = vmatprep.mubr.bf16.mxu0 0
          %731 = vmatmul.mubr.bf16.gmra.mrb[0].mxu0 %v605
          %v732 = vpop.f32.mrb[0].mxu0
          %v733 = vadd.f32 %v632, %v732
          %v734 = vpop.f32.mrb[0].mxu0
          %v735 = vpop.f32.mrb[0].mxu0
          %v736 = vadd.f32 %v632, %v735
          %v737 = vpop.f32.mrb[0].mxu0
          %738 = vmatprep.mubr.bf16.mxu0 0
          %739 = vmatmul.mubr.bf16.gmra.mrb[0].mxu0 %v606
          %v740 = vpop.f32.mrb[0].mxu0
          %v741 = vadd.f32 %v632, %v740
          %v742 = vpop.f32.mrb[0].mxu0
          %v743 = vpop.f32.mrb[0].mxu0
          %v744 = vadd.f32 %v632, %v743
          %v745 = vpop.f32.mrb[0].mxu0
          %746 = vmatprep.mubr.bf16.mxu0 0
          %747 = vmatmul.mubr.bf16.gmra.mrb[0].mxu0 %v607
          %v748 = vpop.f32.mrb[0].mxu0
          %v749 = vadd.f32 %v632, %v748
          %v750 = vpop.f32.mrb[0].mxu0
          %v751 = vpop.f32.mrb[0].mxu0
          %v752 = vadd.f32 %v632, %v751
          %v753 = vpop.f32.mrb[0].mxu0
          %754 = vmatprep.mubr.bf16.mxu0 0
          %755 = vmatmul.mubr.bf16.gmra.mrb[0].mxu0 %v608
          %v756 = vpop.f32.mrb[0].mxu0
          %v757 = vadd.f32 %v632, %v756
          %v758 = vpop.f32.mrb[0].mxu0
          %v759 = vpop.f32.mrb[0].mxu0
          %v760 = vadd.f32 %v632, %v759
          %v761 = vpop.f32.mrb[0].mxu0
          %762 = vmatprep.mubr.bf16.mxu0 0
          %763 = vmatmul.mubr.bf16.gmra.mrb[0].mxu0 %v609
          %v764 = vpop.f32.mrb[0].mxu0
          %v765 = vadd.f32 %v632, %v764
          %v766 = vpop.f32.mrb[0].mxu0
          %v767 = vpop.f32.mrb[0].mxu0
          %v768 = vadd.f32 %v632, %v767
          %v769 = vpop.f32.mrb[0].mxu0
          %770 = vmatprep.mubr.bf16.mxu0 0
          %771 = vmatmul.mubr.bf16.gmra.mrb[0].mxu0 %v610
          %v772 = vpop.f32.mrb[0].mxu0
          %v773 = vadd.f32 %v632, %v772
          %v774 = vpop.f32.mrb[0].mxu0
          %v775 = vpop.f32.mrb[0].mxu0
          %v776 = vadd.f32 %v632, %v775
          %v777 = vpop.f32.mrb[0].mxu0
          %778 = vdwg.mxu0
          %v779 = vmax.f32 %v717, 0.0
          %v780 = vmax.f32 %v720, 0.0
          %v781 = vmax.f32 %v725, 0.0
          %v782 = vmax.f32 %v728, 0.0
          %v783 = vmax.f32 %v733, 0.0
          %v784 = vmax.f32 %v736, 0.0
          %v785 = vmax.f32 %v741, 0.0
          %v786 = vmax.f32 %v744, 0.0
          %v787 = vmax.f32 %v749, 0.0
          %v788 = vmax.f32 %v752, 0.0
          %v789 = vmax.f32 %v757, 0.0
          %v790 = vmax.f32 %v760, 0.0
          %v791 = vmax.f32 %v765, 0.0
          %v792 = vmax.f32 %v768, 0.0
          %v793 = vmax.f32 %v773, 0.0
          %v794 = vmax.f32 %v776, 0.0
          %v795 = vpack.c.bf16 %v780, %v779
          %v796 = vpack.c.bf16 %v782, %v781
          %v797 = vpack.c.bf16 %v784, %v783
          %v798 = vpack.c.bf16 %v786, %v785
          %v799 = vpack.c.bf16 %v788, %v787
          %v800 = vpack.c.bf16 %v790, %v789
          %v801 = vpack.c.bf16 %v792, %v791
          %v802 = vpack.c.bf16 %v794, %v793
          %v811 = vunpack.c.l.b16 %v795
          %v812 = vunpack.c.h.b16 %v795
          %v813 = vunpack.c.l.b16 %v796
          %v814 = vunpack.c.h.b16 %v796
          %v815 = vunpack.c.l.b16 %v797
          %v816 = vunpack.c.h.b16 %v797
          %v817 = vunpack.c.l.b16 %v798
          %v818 = vunpack.c.h.b16 %v798
          %v819 = vunpack.c.l.b16 %v799
          %v820 = vunpack.c.h.b16 %v799
          %v821 = vunpack.c.l.b16 %v800
          %v822 = vunpack.c.h.b16 %v800
          %v823 = vunpack.c.l.b16 %v801
          %v824 = vunpack.c.h.b16 %v801
          %v825 = vunpack.c.l.b16 %v802
          %v826 = vunpack.c.h.b16 %v802
          %v827 = vpack.c.b16 %v811, %v811
          %v828 = vpack.c.b16 %v812, %v812
          %v829 = vpack.c.b16 %v813, %v813
          %v830 = vpack.c.b16 %v814, %v814
          %v831 = vpack.c.b16 %v815, %v815
          %v832 = vpack.c.b16 %v816, %v816
          %v833 = vpack.c.b16 %v817, %v817
          %v834 = vpack.c.b16 %v818, %v818
          %v835 = vpack.c.b16 %v819, %v819
          %v836 = vpack.c.b16 %v820, %v820
          %v837 = vpack.c.b16 %v821, %v821
          %v838 = vpack.c.b16 %v822, %v822
          %v839 = vpack.c.b16 %v823, %v823
          %v840 = vpack.c.b16 %v824, %v824
          %v841 = vpack.c.b16 %v825, %v825
          %v842 = vpack.c.b16 %v826, %v826
          %859 = vst [vmem:[%s285] sm:$0xf] %v827
          %860 = vst [vmem:[%s285 + $0x4] sm:$0xf] %v828
          %861 = vst [vmem:[%s285 + $0x8] sm:$0xf] %v829
          %862 = vst [vmem:[%s285 + $0xc] sm:$0xf] %v830
          %863 = vst [vmem:[%s285 + $0x10] sm:$0xf] %v831
          %864 = vst [vmem:[%s285 + $0x14] sm:$0xf] %v832
          %865 = vst [vmem:[%s285 + $0x18] sm:$0xf] %v833
          %866 = vst [vmem:[%s285 + $0x1c] sm:$0xf] %v834
          %867 = vst [vmem:[%s285 + $0x20] sm:$0xf] %v835
          %868 = vst [vmem:[%s285 + $0x24] sm:$0xf] %v836
          %869 = vst [vmem:[%s285 + $0x28] sm:$0xf] %v837
          %870 = vst [vmem:[%s285 + $0x2c] sm:$0xf] %v838
          %871 = vst [vmem:[%s285 + $0x30] sm:$0xf] %v839
          %872 = vst [vmem:[%s285 + $0x34] sm:$0xf] %v840
          %873 = vst [vmem:[%s285 + $0x38] sm:$0xf] %v841
          %874 = vst [vmem:[%s285 + $0x3c] sm:$0xf] %v842
        $region56: #{tpu_custom_call.1} parent=35 // pred_fallthru
          _
        %s875 = sand.u32 %s140, 1
        %s876 = scalar_lea.sflag [#allocation5], %s875
        %s877 = sand.u32 %s140, 1
        %s878 = smul.addr %s877, 64
        %s879 = scalar_lea.vmem [#allocation9], %s878
        // Predicated region
        $region57: #{tpu_custom_call.1} parent=35 // pred_check
          %p880 = pneg %p150
        $region58: #{tpu_custom_call.1} parent=35 // pred_check_branch
          %882 = sbr.rel (%p880) target = $region60
        $region59: #{tpu_custom_call.1} parent=35 // pred_region
          %s883 = smul.u32 16, %s28
          %s885 = ssub.s32 1024, 1024
          %886 = vsyncadd %s876, %s885
          %s887 = smul.addr %s883, 64
          %s888 = scalar_lea.hbm %s4, %s887
          %s889 = sshll.u32 %s879, 4
          %s890 = int_to_ptr.vmem [resolvable:$true] %s889
          %895 = dma.vmem_to_hbm [thread:$0]  %s890, 1024, %s888, %s876, 64, 64, 4
        $region60: #{tpu_custom_call.1} parent=35 // pred_fallthru
          _
      $region36: #{tpu_custom_call.1} parent=5 // pred_fallthru
        _
      %p896 = scmp.le.s32.totalorder 2, %s19
      // Predicated region
      $region61: #{tpu_custom_call.1} parent=5 // pred_check
        %p897 = pneg %p896
      $region62: #{tpu_custom_call.1} parent=5 // pred_check_branch
        %899 = sbr.rel (%p897) target = $region64
      $region63: #{tpu_custom_call.1} parent=5 // pred_region
        %s900 = ssub.s32 %s19, 2
        // Predicated region
        $region65: #{tpu_custom_call.1} parent=63 // pred_check
          %p901 = pneg %p156
        $region66: #{tpu_custom_call.1} parent=63 // pred_check_branch
          %903 = sbr.rel (%p901) target = $region68
        $region67: #{tpu_custom_call.1} parent=63 // pred_region
          %s904 = sand.u32 %s141, 1
          %s905 = scalar_lea.sflag [#allocation5], %s904
          %s906 = sand.u32 %s141, 1
          %s907 = smul.addr %s906, 64
          %s908 = scalar_lea.vmem [#allocation9], %s907
          %909 = dma.done %s905, 1024
        $region68: #{tpu_custom_call.1} parent=63 // pred_fallthru
          _
      $region64: #{tpu_custom_call.1} parent=5 // pred_fallthru
        _
    $region6: #{tpu_custom_call.1} parent=1 // loop_footer
      %s23 = sadd.s32 1, %s19
    $region7: #{tpu_custom_call.1} parent=1 // loop_footer_branch
      %18 = sbr.rel target = $region3
    $region8: #{tpu_custom_call.1} parent=1 // loop_exit
      _
    %910 = vsyncpa [#allocation4], 1
    %s911 = scalar_lea.sflag [#allocation4], 1
    %912 = vsyncpa %s911, 1
    %913 = vsyncpa [#allocation7], 1
    %s914 = scalar_lea.sflag [#allocation7], 1
    %915 = vsyncpa %s914, 1
    %916 = vsyncpa [#allocation5], 1
    %s917 = scalar_lea.sflag [#allocation5], 1
    %918 = vsyncpa %s917, 1

</llo_original>
